<compile_context>
chip_gen: v6e
topology: v6e:2x2x1
jax: 0.10.0
libtpu: 0.0.40
codegen_flags: <defaults>
</compile_context>

<pallas_src>
import jax
import jax.numpy as jnp
from jax.experimental import pallas as pl
from jax.experimental.pallas import tpu as pltpu

HIDDEN = 256
OUT_PAD = 128          # lane-dense padded width for the final 256->1 layer
BN_EPS = 1e-5
LRELU_SLOPE = 0.01     # PyTorch nn.LeakyReLU() default negative_slope


def _bn_lrelu(h, gamma, beta):
    """Training-mode BatchNorm1d + LeakyReLU, fused. h: (B, H) float32."""
    mean = jnp.mean(h, axis=0, keepdims=True)
    var = jnp.mean(h * h, axis=0, keepdims=True) - mean * mean   # biased var
    scale = gamma * jax.lax.rsqrt(var + BN_EPS)                  # EUP rsqrt
    shift = beta - mean * scale
    y = h * scale + shift
    return jnp.maximum(y, LRELU_SLOPE * y)                       # LeakyReLU


def wgan_disc_kernel(x_ref, w1_ref, w2_ref, w3_ref, w4p_ref, feat_ref, out_ref):
    # x_ref block: (1, B, D); weights are grid-resident (constant index_map).
    x = x_ref[0].astype(jnp.bfloat16)                            # (B, D)
    feat = feat_ref[...]                                         # (6, H) f32
    g1, be1 = feat[0:1], feat[1:2]
    g2, be2 = feat[2:3], feat[3:4]
    g3, be3 = feat[4:5], feat[5:6]

    # Pre-BN biases omitted: exactly cancelled by the batch-mean subtraction.
    h = jnp.dot(x, w1_ref[...], preferred_element_type=jnp.float32)
    h = _bn_lrelu(h, g1, be1)

    h = jnp.dot(h.astype(jnp.bfloat16), w2_ref[...],
                preferred_element_type=jnp.float32)
    h = _bn_lrelu(h, g2, be2)

    h = jnp.dot(h.astype(jnp.bfloat16), w3_ref[...],
                preferred_element_type=jnp.float32)
    h = _bn_lrelu(h, g3, be3)

    # Final layer padded to 128 output lanes -> unmasked lane-dense store.
    out_ref[0] = jnp.dot(h.astype(jnp.bfloat16), w4p_ref[...],
                         preferred_element_type=jnp.float32)


def wgan_disc_forward(x, params):
    """x: (B, D) single minibatch, or (G, B, D) stacked independent minibatches
    (BatchNorm statistics are computed per minibatch, matching G separate
    forward passes of the PyTorch module)."""
    (w1, b1, g1, be1, w2, b2, g2, be2, w3, b3, g3, be3, w4, b4) = params

    squeeze = (x.ndim == 2)
    if squeeze:
        x = x[None]
    G, B, D = x.shape
    H = w1.shape[1]

    # bf16 weights for the MXU (f32 accumulation inside the kernel).
    w1b = w1.astype(jnp.bfloat16)
    w2b = w2.astype(jnp.bfloat16)
    w3b = w3.astype(jnp.bfloat16)
    w4p = jnp.zeros((H, OUT_PAD), jnp.bfloat16).at[:, :1].set(
        w4.astype(jnp.bfloat16))
    # Pack the six per-feature (1,H) vectors into one input.
    feat = jnp.concatenate([g1, be1, g2, be2, g3, be3], axis=0)   # (6, H) f32

    out = pl.pallas_call(
        wgan_disc_kernel,
        out_shape=jax.ShapeDtypeStruct((G, B, OUT_PAD), jnp.float32),
        grid=(G,),
        in_specs=[
            pl.BlockSpec((1, B, D), lambda g: (g, 0, 0)),       # x: tiled
            pl.BlockSpec((D, H), lambda g: (0, 0)),             # weights:
            pl.BlockSpec((H, H), lambda g: (0, 0)),             #   resident
            pl.BlockSpec((H, H), lambda g: (0, 0)),             #   across the
            pl.BlockSpec((H, OUT_PAD), lambda g: (0, 0)),       #   grid
            pl.BlockSpec((6, H), lambda g: (0, 0)),             # packed g/beta
        ],
        out_specs=pl.BlockSpec((1, B, OUT_PAD), lambda g: (g, 0, 0)),
        compiler_params=pltpu.CompilerParams(
            dimension_semantics=("parallel",)),                  # 2 TCs on v7x
    )(x, w1b, w2b, w3b, w4p, feat)

    logits = out[..., :1] + b4          # fold final bias outside the kernel
    return logits[0] if squeeze else logits


def init_params(key, input_dim, hidden=HIDDEN):
    """Deterministic synthetic init (shapes match the PyTorch module)."""
    ks = jax.random.split(key, 8)

    def linear(kw, kb, fan_in, fan_out):
        bound = 1.0 / jnp.sqrt(fan_in)
        w = jax.random.uniform(kw, (fan_in, fan_out), jnp.float32, -bound, bound)
        # Round-trip weights through bf16 so the kernel (bf16 MXU) and the f32
        # reference operate on identical parameter values.
        w = w.astype(jnp.bfloat16).astype(jnp.float32)
        b = jax.random.uniform(kb, (1, fan_out), jnp.float32, -bound, bound)
        return w, b

    w1, b1 = linear(ks[0], ks[1], input_dim, hidden)
    w2, b2 = linear(ks[2], ks[3], hidden, hidden)
    w3, b3 = linear(ks[4], ks[5], hidden, hidden)
    w4, b4 = linear(ks[6], ks[7], hidden, 1)

    ones = jnp.ones((1, hidden), jnp.float32)
    zeros = jnp.zeros((1, hidden), jnp.float32)

    return (
        w1, b1, ones, zeros,
        w2, b2, ones, zeros,
        w3, b3, ones, zeros,
        w4, b4,
    )


def reference_forward(x, params):
    """Pure-JAX f32 reference matching the PyTorch module (training-mode BN,
    biases included)."""
    (w1, b1, g1, be1, w2, b2, g2, be2, w3, b3, g3, be3, w4, b4) = params

    def bn_lrelu(h, g, be):
        m = jnp.mean(h, axis=0, keepdims=True)
        v = jnp.mean((h - m) ** 2, axis=0, keepdims=True)
        hh = (h - m) / jnp.sqrt(v + BN_EPS) * g + be
        return jnp.where(hh >= 0, hh, LRELU_SLOPE * hh)

    def single(xb):
        h = bn_lrelu(xb @ w1 + b1, g1, be1)
        h = bn_lrelu(h @ w2 + b2, g2, be2)
        h = bn_lrelu(h @ w3 + b3, g3, be3)
        return h @ w4 + b4

    if x.ndim == 2:
        return single(x)
    return jax.vmap(single)(x)


if __name__ == "__main__":
    G, B, INPUT_DIM = 2, 8, 32   # 2 stacked minibatches of 8

    key = jax.random.PRNGKey(0)
    kx, kp = jax.random.split(key)
    x = jax.random.normal(kx, (G, B, INPUT_DIM), dtype=jnp.float32)
    params = init_params(kp, INPUT_DIM)

    logits = wgan_disc_forward(x, params)
    logits = jax.block_until_ready(logits)

    ref = reference_forward(x, params)
    assert logits.shape == (G, B, 1)
    # bf16 matmul inputs -> relaxed tolerance vs the f32 reference.
    err = jnp.max(jnp.abs(logits - ref))
    assert jnp.allclose(logits, ref, atol=3e-2, rtol=3e-2), f"max abs err {err}"

    print("KERNEL_OK")
</pallas_src>

<mosaic_0001>
module attributes {stable_mosaic.version = 11 : i64} {
  func.func @wgan_disc_kernel(%arg0: i32, %arg1: memref<1x8x32xf32, #tpu.memory_space<vmem>>, %arg2: memref<32x256xbf16, #tpu.memory_space<vmem>>, %arg3: memref<256x256xbf16, #tpu.memory_space<vmem>>, %arg4: memref<256x256xbf16, #tpu.memory_space<vmem>>, %arg5: memref<256x128xbf16, #tpu.memory_space<vmem>>, %arg6: memref<6x256xf32, #tpu.memory_space<vmem>>, %arg7: memref<1x8x128xf32, #tpu.memory_space<vmem>>) attributes {dimension_semantics = [#tpu.dimension_semantics<parallel>], iteration_bounds = array<i64: 2>, scalar_prefetch = 0 : i64, scratch_operands = 0 : i64, tpu.core_type = #tpu.core_type<tc>, window_params = [{transform_indices = @transform_0, window_bounds = array<i64: 1, 8, 32>}, {pipeline_mode = #tpu.pipeline_mode<synchronous>, transform_indices = @transform_1, window_bounds = array<i64: 32, 256>}, {pipeline_mode = #tpu.pipeline_mode<synchronous>, transform_indices = @transform_2, window_bounds = array<i64: 256, 256>}, {pipeline_mode = #tpu.pipeline_mode<synchronous>, transform_indices = @transform_3, window_bounds = array<i64: 256, 256>}, {pipeline_mode = #tpu.pipeline_mode<synchronous>, transform_indices = @transform_4, window_bounds = array<i64: 256, 128>}, {pipeline_mode = #tpu.pipeline_mode<synchronous>, transform_indices = @transform_5, window_bounds = array<i64: 6, 256>}, {transform_indices = @transform_6, window_bounds = array<i64: 1, 8, 128>}]} {
    %c0 = arith.constant 0 : index
    %c0_0 = arith.constant 0 : index
    %c0_1 = arith.constant 0 : index
    %0 = vector.load %arg1[%c0, %c0_0, %c0_1] : memref<1x8x32xf32, #tpu.memory_space<vmem>>, vector<1x8x32xf32>
    %1 = vector.shape_cast %0 : vector<1x8x32xf32> to vector<8x32xf32>
    %2 = arith.truncf %1 : vector<8x32xf32> to vector<8x32xbf16>
    %c0_2 = arith.constant 0 : index
    %c0_3 = arith.constant 0 : index
    %3 = vector.load %arg6[%c0_2, %c0_3] : memref<6x256xf32, #tpu.memory_space<vmem>>, vector<6x256xf32>
    %4 = vector.extract_strided_slice %3 {offsets = [0, 0], sizes = [1, 256], strides = [1, 1]} : vector<6x256xf32> to vector<1x256xf32>
    %5 = vector.extract_strided_slice %3 {offsets = [1, 0], sizes = [1, 256], strides = [1, 1]} : vector<6x256xf32> to vector<1x256xf32>
    %6 = vector.extract_strided_slice %3 {offsets = [2, 0], sizes = [1, 256], strides = [1, 1]} : vector<6x256xf32> to vector<1x256xf32>
    %7 = vector.extract_strided_slice %3 {offsets = [3, 0], sizes = [1, 256], strides = [1, 1]} : vector<6x256xf32> to vector<1x256xf32>
    %8 = vector.extract_strided_slice %3 {offsets = [4, 0], sizes = [1, 256], strides = [1, 1]} : vector<6x256xf32> to vector<1x256xf32>
    %9 = vector.extract_strided_slice %3 {offsets = [5, 0], sizes = [1, 256], strides = [1, 1]} : vector<6x256xf32> to vector<1x256xf32>
    %c0_4 = arith.constant 0 : index
    %c0_5 = arith.constant 0 : index
    %10 = vector.load %arg2[%c0_4, %c0_5] : memref<32x256xbf16, #tpu.memory_space<vmem>>, vector<32x256xbf16>
    %cst = arith.constant dense<0.000000e+00> : vector<8x256xf32>
    %11 = tpu.matmul %2, %10, %cst {dimension_numbers = #tpu.dot_dimension_numbers<[1], [0], [0], [1], [0, 0, 1, 1], [], []>} : vector<8x32xbf16>, vector<32x256xbf16>, vector<8x256xf32> -> vector<8x256xf32>
    %cst_6 = arith.constant dense<0.000000e+00> : vector<256xf32>
    %12 = vector.multi_reduction <add>, %11, %cst_6 [0] : vector<8x256xf32> to vector<256xf32>
    %13 = vector.shape_cast %12 : vector<256xf32> to vector<1x256xf32>
    %cst_7 = arith.constant 8.000000e+00 : f32
    %14 = vector.broadcast %cst_7 : f32 to vector<1x256xf32>
    %15 = arith.divf %13, %14 : vector<1x256xf32>
    %16 = arith.mulf %11, %11 : vector<8x256xf32>
    %cst_8 = arith.constant dense<0.000000e+00> : vector<256xf32>
    %17 = vector.multi_reduction <add>, %16, %cst_8 [0] : vector<8x256xf32> to vector<256xf32>
    %18 = vector.shape_cast %17 : vector<256xf32> to vector<1x256xf32>
    %cst_9 = arith.constant 8.000000e+00 : f32
    %19 = vector.broadcast %cst_9 : f32 to vector<1x256xf32>
    %20 = arith.divf %18, %19 : vector<1x256xf32>
    %21 = arith.mulf %15, %15 : vector<1x256xf32>
    %22 = arith.subf %20, %21 : vector<1x256xf32>
    %cst_10 = arith.constant 9.99999974E-6 : f32
    %23 = vector.broadcast %cst_10 : f32 to vector<1x256xf32>
    %24 = arith.addf %22, %23 : vector<1x256xf32>
    %25 = math.rsqrt %24 : vector<1x256xf32>
    %26 = arith.mulf %4, %25 : vector<1x256xf32>
    %27 = arith.mulf %15, %26 : vector<1x256xf32>
    %28 = arith.subf %5, %27 : vector<1x256xf32>
    %29 = vector.broadcast %26 : vector<1x256xf32> to vector<8x256xf32>
    %30 = arith.mulf %11, %29 : vector<8x256xf32>
    %31 = vector.broadcast %28 : vector<1x256xf32> to vector<8x256xf32>
    %32 = arith.addf %30, %31 : vector<8x256xf32>
    %cst_11 = arith.constant 0.00999999977 : f32
    %33 = vector.broadcast %cst_11 : f32 to vector<8x256xf32>
    %34 = arith.mulf %33, %32 : vector<8x256xf32>
    %35 = arith.maximumf %32, %34 : vector<8x256xf32>
    %36 = arith.truncf %35 : vector<8x256xf32> to vector<8x256xbf16>
    %c0_12 = arith.constant 0 : index
    %c0_13 = arith.constant 0 : index
    %37 = vector.load %arg3[%c0_12, %c0_13] : memref<256x256xbf16, #tpu.memory_space<vmem>>, vector<256x256xbf16>
    %cst_14 = arith.constant dense<0.000000e+00> : vector<8x256xf32>
    %38 = tpu.matmul %36, %37, %cst_14 {dimension_numbers = #tpu.dot_dimension_numbers<[1], [0], [0], [1], [0, 0, 1, 1], [], []>} : vector<8x256xbf16>, vector<256x256xbf16>, vector<8x256xf32> -> vector<8x256xf32>
    %cst_15 = arith.constant dense<0.000000e+00> : vector<256xf32>
    %39 = vector.multi_reduction <add>, %38, %cst_15 [0] : vector<8x256xf32> to vector<256xf32>
    %40 = vector.shape_cast %39 : vector<256xf32> to vector<1x256xf32>
    %cst_16 = arith.constant 8.000000e+00 : f32
    %41 = vector.broadcast %cst_16 : f32 to vector<1x256xf32>
    %42 = arith.divf %40, %41 : vector<1x256xf32>
    %43 = arith.mulf %38, %38 : vector<8x256xf32>
    %cst_17 = arith.constant dense<0.000000e+00> : vector<256xf32>
    %44 = vector.multi_reduction <add>, %43, %cst_17 [0] : vector<8x256xf32> to vector<256xf32>
    %45 = vector.shape_cast %44 : vector<256xf32> to vector<1x256xf32>
    %cst_18 = arith.constant 8.000000e+00 : f32
    %46 = vector.broadcast %cst_18 : f32 to vector<1x256xf32>
    %47 = arith.divf %45, %46 : vector<1x256xf32>
    %48 = arith.mulf %42, %42 : vector<1x256xf32>
    %49 = arith.subf %47, %48 : vector<1x256xf32>
    %cst_19 = arith.constant 9.99999974E-6 : f32
    %50 = vector.broadcast %cst_19 : f32 to vector<1x256xf32>
    %51 = arith.addf %49, %50 : vector<1x256xf32>
    %52 = math.rsqrt %51 : vector<1x256xf32>
    %53 = arith.mulf %6, %52 : vector<1x256xf32>
    %54 = arith.mulf %42, %53 : vector<1x256xf32>
    %55 = arith.subf %7, %54 : vector<1x256xf32>
    %56 = vector.broadcast %53 : vector<1x256xf32> to vector<8x256xf32>
    %57 = arith.mulf %38, %56 : vector<8x256xf32>
    %58 = vector.broadcast %55 : vector<1x256xf32> to vector<8x256xf32>
    %59 = arith.addf %57, %58 : vector<8x256xf32>
    %cst_20 = arith.constant 0.00999999977 : f32
    %60 = vector.broadcast %cst_20 : f32 to vector<8x256xf32>
    %61 = arith.mulf %60, %59 : vector<8x256xf32>
    %62 = arith.maximumf %59, %61 : vector<8x256xf32>
    %63 = arith.truncf %62 : vector<8x256xf32> to vector<8x256xbf16>
    %c0_21 = arith.constant 0 : index
    %c0_22 = arith.constant 0 : index
    %64 = vector.load %arg4[%c0_21, %c0_22] : memref<256x256xbf16, #tpu.memory_space<vmem>>, vector<256x256xbf16>
    %cst_23 = arith.constant dense<0.000000e+00> : vector<8x256xf32>
    %65 = tpu.matmul %63, %64, %cst_23 {dimension_numbers = #tpu.dot_dimension_numbers<[1], [0], [0], [1], [0, 0, 1, 1], [], []>} : vector<8x256xbf16>, vector<256x256xbf16>, vector<8x256xf32> -> vector<8x256xf32>
    %cst_24 = arith.constant dense<0.000000e+00> : vector<256xf32>
    %66 = vector.multi_reduction <add>, %65, %cst_24 [0] : vector<8x256xf32> to vector<256xf32>
    %67 = vector.shape_cast %66 : vector<256xf32> to vector<1x256xf32>
    %cst_25 = arith.constant 8.000000e+00 : f32
    %68 = vector.broadcast %cst_25 : f32 to vector<1x256xf32>
    %69 = arith.divf %67, %68 : vector<1x256xf32>
    %70 = arith.mulf %65, %65 : vector<8x256xf32>
    %cst_26 = arith.constant dense<0.000000e+00> : vector<256xf32>
    %71 = vector.multi_reduction <add>, %70, %cst_26 [0] : vector<8x256xf32> to vector<256xf32>
    %72 = vector.shape_cast %71 : vector<256xf32> to vector<1x256xf32>
    %cst_27 = arith.constant 8.000000e+00 : f32
    %73 = vector.broadcast %cst_27 : f32 to vector<1x256xf32>
    %74 = arith.divf %72, %73 : vector<1x256xf32>
    %75 = arith.mulf %69, %69 : vector<1x256xf32>
    %76 = arith.subf %74, %75 : vector<1x256xf32>
    %cst_28 = arith.constant 9.99999974E-6 : f32
    %77 = vector.broadcast %cst_28 : f32 to vector<1x256xf32>
    %78 = arith.addf %76, %77 : vector<1x256xf32>
    %79 = math.rsqrt %78 : vector<1x256xf32>
    %80 = arith.mulf %8, %79 : vector<1x256xf32>
    %81 = arith.mulf %69, %80 : vector<1x256xf32>
    %82 = arith.subf %9, %81 : vector<1x256xf32>
    %83 = vector.broadcast %80 : vector<1x256xf32> to vector<8x256xf32>
    %84 = arith.mulf %65, %83 : vector<8x256xf32>
    %85 = vector.broadcast %82 : vector<1x256xf32> to vector<8x256xf32>
    %86 = arith.addf %84, %85 : vector<8x256xf32>
    %cst_29 = arith.constant 0.00999999977 : f32
    %87 = vector.broadcast %cst_29 : f32 to vector<8x256xf32>
    %88 = arith.mulf %87, %86 : vector<8x256xf32>
    %89 = arith.maximumf %86, %88 : vector<8x256xf32>
    %90 = arith.truncf %89 : vector<8x256xf32> to vector<8x256xbf16>
    %c0_30 = arith.constant 0 : index
    %c0_31 = arith.constant 0 : index
    %91 = vector.load %arg5[%c0_30, %c0_31] : memref<256x128xbf16, #tpu.memory_space<vmem>>, vector<256x128xbf16>
    %cst_32 = arith.constant dense<0.000000e+00> : vector<8x128xf32>
    %92 = tpu.matmul %90, %91, %cst_32 {dimension_numbers = #tpu.dot_dimension_numbers<[1], [0], [0], [1], [0, 0, 1, 1], [], []>} : vector<8x256xbf16>, vector<256x128xbf16>, vector<8x128xf32> -> vector<8x128xf32>
    %c0_33 = arith.constant 0 : index
    %c0_34 = arith.constant 0 : index
    %c0_35 = arith.constant 0 : index
    %93 = vector.load %arg7[%c0_33, %c0_34, %c0_35] : memref<1x8x128xf32, #tpu.memory_space<vmem>>, vector<1x8x128xf32>
    %94 = vector.shape_cast %93 : vector<1x8x128xf32> to vector<8x128xf32>
    %95 = vector.shape_cast %92 : vector<8x128xf32> to vector<1x8x128xf32>
    tpu.vector_store %arg7[%c0_33, %c0_34, %c0_35], %95 {strides = array<i32>} : memref<1x8x128xf32, #tpu.memory_space<vmem>>, vector<1x8x128xf32>,
    return
  }
  func.func @transform_0(%arg0: i32) -> (i32, i32, i32) {
    %c0_i32 = arith.constant 0 : i32
    %c0_i32_0 = arith.constant 0 : i32
    %c0_i32_1 = arith.constant 0 : i32
    return %arg0, %c0_i32, %c0_i32_0 : i32, i32, i32
  }
  func.func @transform_1(%arg0: i32) -> (i32, i32) {
    %c0_i32 = arith.constant 0 : i32
    %c0_i32_0 = arith.constant 0 : i32
    %c0_i32_1 = arith.constant 0 : i32
    return %c0_i32, %c0_i32_0 : i32, i32
  }
  func.func @transform_2(%arg0: i32) -> (i32, i32) {
    %c0_i32 = arith.constant 0 : i32
    %c0_i32_0 = arith.constant 0 : i32
    %c0_i32_1 = arith.constant 0 : i32
    return %c0_i32, %c0_i32_0 : i32, i32
  }
  func.func @transform_3(%arg0: i32) -> (i32, i32) {
    %c0_i32 = arith.constant 0 : i32
    %c0_i32_0 = arith.constant 0 : i32
    %c0_i32_1 = arith.constant 0 : i32
    return %c0_i32, %c0_i32_0 : i32, i32
  }
  func.func @transform_4(%arg0: i32) -> (i32, i32) {
    %c0_i32 = arith.constant 0 : i32
    %c0_i32_0 = arith.constant 0 : i32
    %c0_i32_1 = arith.constant 0 : i32
    return %c0_i32, %c0_i32_0 : i32, i32
  }
  func.func @transform_5(%arg0: i32) -> (i32, i32) {
    %c0_i32 = arith.constant 0 : i32
    %c0_i32_0 = arith.constant 0 : i32
    %c0_i32_1 = arith.constant 0 : i32
    return %c0_i32, %c0_i32_0 : i32, i32
  }
  func.func @transform_6(%arg0: i32) -> (i32, i32, i32) {
    %c0_i32 = arith.constant 0 : i32
    %c0_i32_0 = arith.constant 0 : i32
    %c0_i32_1 = arith.constant 0 : i32
    return %arg0, %c0_i32, %c0_i32_0 : i32, i32, i32
  }
}

</mosaic_0001>

<llo_original>
// kernel: tpu_custom_call.1
$region0: #{tpu_custom_call.1}
  #allocation0 [shape = 'u32[]', space=smem, size = 0x4, offset = 0x4, fixed_abs, tag = 'smem constant byte address 0x4 - core index']
  #allocation1 [shape = 'u32[144,128]{1,0:T(1,128)}', space=vmem, size = 0x12000, scoped, tag = 'internal scratch']
  %s0 = inlined_call_operand.hbm [shape: f32[2,8,32], index: 0, kind: input, shape index: {}]
  %s1 = inlined_call_operand.hbm [shape: bf16[32,256], index: 1, kind: input, shape index: {}]
  %s2 = inlined_call_operand.hbm [shape: bf16[256,256], index: 2, kind: input, shape index: {}]
  %s3 = inlined_call_operand.hbm [shape: bf16[256,256], index: 3, kind: input, shape index: {}]
  %s4 = inlined_call_operand.hbm [shape: bf16[256,128], index: 4, kind: input, shape index: {}]
  %s5 = inlined_call_operand.hbm [shape: f32[6,256], index: 5, kind: input, shape index: {}]
  %s6 = inlined_call_operand.hbm [shape: f32[2,8,128], index: 6, kind: output, shape index: {}]
  %s7 = sld [smem:[#allocation0]]
  $region81: #{tpu_custom_call.1} parent=0
    _
  %s9 = ssub.s32 1, %s7
  %s10 = scalar_select 0, %s9, %s7
  $region1: #{tpu_custom_call.1} parent=0
    #allocation2 [shape = 'u8[8192]{0}', space=vmem, size = 0x2000, scoped, tag = 'input window, operand 0']
    #allocation3 [shape = 's32[2]{0}', space=sflag, size = 0x8, scoped, tag = 'scoped memory for tpu_custom_call.1']
    #allocation4 [shape = 's32[2]{0}', space=sflag, size = 0x8, scoped, tag = 'scoped memory for tpu_custom_call.1']
    #allocation5 [shape = 'u8[16384]{0}', space=vmem, size = 0x4000, scoped, tag = 'input window, operand 1, single buffered']
    #allocation6 [shape = 's32[1]{0}', space=sflag, size = 0x4, scoped, tag = 'scoped memory for tpu_custom_call.1']
    #allocation7 [shape = 'u8[131072]{0}', space=vmem, size = 0x20000, scoped, tag = 'input window, operand 2, single buffered']
    #allocation8 [shape = 'u8[131072]{0}', space=vmem, size = 0x20000, scoped, tag = 'input window, operand 3, single buffered']
    #allocation9 [shape = 's32[1]{0}', space=sflag, size = 0x4, scoped, tag = 'scoped memory for tpu_custom_call.1']
    #allocation10 [shape = 'u8[65536]{0}', space=vmem, size = 0x10000, scoped, tag = 'input window, operand 4, single buffered']
    #allocation11 [shape = 'u8[8192]{0}', space=vmem, size = 0x2000, scoped, tag = 'input window, operand 5, single buffered']
    #allocation12 [shape = 's32[1]{0}', space=sflag, size = 0x4, scoped, tag = 'scoped memory for tpu_custom_call.1']
    #allocation13 [shape = 'u8[8192]{0}', space=vmem, size = 0x2000, scoped, tag = 'output window, operand 0']
    %11 = vsyncpa [#allocation3], 0
    %s12 = scalar_lea.sflag [#allocation3], 1
    %13 = vsyncpa %s12, 0
    %14 = vsyncpa [#allocation6], 0
    %15 = vsyncpa [#allocation9], 0
    %16 = vsyncpa [#allocation12], 0
    %17 = vsyncpa [#allocation4], 0
    %s18 = scalar_lea.sflag [#allocation4], 1
    %19 = vsyncpa %s18, 0
    loop: start=0, step=1, limit=4
    $region2: #{tpu_custom_call.1} parent=1 // loop_pre_header
      _
    $region3: #{tpu_custom_call.1} parent=1 // loop_header
      %s21 = sphi 0, %s25
      %p22 = scmp.ge.s32.totalorder %s21, 4
      %s31 = sphi 0, %s33
      %s34 = sphi 0, %s31
      %s35 = sphi 0, %s34
      %s51 = sphi 0, %s35
      %s55 = sphi 0, %s55
      %s57 = sphi 0, %s55
      %s58 = sphi 0, %s57
      %s72 = sphi 0, %s58
      %s76 = sphi 0, %s76
      %s78 = sphi 0, %s76
      %s79 = sphi 0, %s78
      %s93 = sphi 0, %s79
      %s97 = sphi 0, %s97
      %s99 = sphi 0, %s97
      %s100 = sphi 0, %s99
      %s114 = sphi 0, %s100
      %s118 = sphi 0, %s118
      %s120 = sphi 0, %s118
      %s121 = sphi 0, %s120
      %s135 = sphi 0, %s121
      %s139 = sphi 0, %s139
      %s141 = sphi 0, %s139
      %s142 = sphi 0, %s141
      %s156 = sphi 0, %s142
      %s162 = sphi 0, %s164
      %s165 = sphi 0, %s162
      %s166 = sphi 0, %s165
      %s182 = sphi 0, %s166
    $region4: #{tpu_custom_call.1} parent=1 // loop_header_branch
      %24 = sbr.rel (%p22) target = $region8
    $region5: #{tpu_custom_call.1} parent=1 // loop_body
      %s26 = ssub.s32 %s21, 1
      %s27 = ssub.s32 %s21, 2
      %s28 = sadd.s32 %s21, 1
      %s29 = ssub.s32 %s21, %s28
      %p30 = scmp.eq.s32.totalorder %s29, 0
      %s32 = sadd.s32 %s31, 1
      %s33 = scalar_select %p30, %s31, %s32
      %p36 = pneg %p30
      %p37 = scmp.eq.s32.totalorder %s21, 1
      %p38 = por %p36, %p37
      %p39 = scmp.ne.s32.totalorder %s31, %s34
      %p40 = scmp.eq.s32.totalorder %s21, 0
      %p41 = por %p39, %p40
      %p42 = scmp.ne.s32.totalorder %s31, %s34
      %p43 = scmp.eq.s32.totalorder %s26, 1
      %p44 = por %p42, %p43
      %p45 = scmp.ne.s32.totalorder %s34, %s35
      %p46 = scmp.eq.s32.totalorder %s26, 0
      %p47 = por %p45, %p46
      %p48 = scmp.ne.s32.totalorder %s34, %s35
      %p49 = scmp.eq.s32.totalorder %s27, 1
      %p50 = por %p48, %p49
      %p52 = scmp.ne.s32.totalorder %s35, %s51
      %p53 = scmp.eq.s32.totalorder %s27, 0
      %p54 = por %p52, %p53
      %s56 = sadd.s32 %s55, 1
      %p59 = scmp.eq.s32.totalorder %s21, 1
      %p60 = scmp.ne.s32.totalorder %s55, %s57
      %p61 = scmp.eq.s32.totalorder %s21, 0
      %p62 = por %p60, %p61
      %p63 = scmp.ne.s32.totalorder %s55, %s57
      %p64 = scmp.eq.s32.totalorder %s26, 1
      %p65 = por %p63, %p64
      %p66 = scmp.ne.s32.totalorder %s57, %s58
      %p67 = scmp.eq.s32.totalorder %s26, 0
      %p68 = por %p66, %p67
      %p69 = scmp.ne.s32.totalorder %s57, %s58
      %p70 = scmp.eq.s32.totalorder %s27, 1
      %p71 = por %p69, %p70
      %p73 = scmp.ne.s32.totalorder %s58, %s72
      %p74 = scmp.eq.s32.totalorder %s27, 0
      %p75 = por %p73, %p74
      %s77 = sadd.s32 %s76, 1
      %p80 = scmp.eq.s32.totalorder %s21, 1
      %p81 = scmp.ne.s32.totalorder %s76, %s78
      %p82 = scmp.eq.s32.totalorder %s21, 0
      %p83 = por %p81, %p82
      %p84 = scmp.ne.s32.totalorder %s76, %s78
      %p85 = scmp.eq.s32.totalorder %s26, 1
      %p86 = por %p84, %p85
      %p87 = scmp.ne.s32.totalorder %s78, %s79
      %p88 = scmp.eq.s32.totalorder %s26, 0
      %p89 = por %p87, %p88
      %p90 = scmp.ne.s32.totalorder %s78, %s79
      %p91 = scmp.eq.s32.totalorder %s27, 1
      %p92 = por %p90, %p91
      %p94 = scmp.ne.s32.totalorder %s79, %s93
      %p95 = scmp.eq.s32.totalorder %s27, 0
      %p96 = por %p94, %p95
      %s98 = sadd.s32 %s97, 1
      %p101 = scmp.eq.s32.totalorder %s21, 1
      %p102 = scmp.ne.s32.totalorder %s97, %s99
      %p103 = scmp.eq.s32.totalorder %s21, 0
      %p104 = por %p102, %p103
      %p105 = scmp.ne.s32.totalorder %s97, %s99
      %p106 = scmp.eq.s32.totalorder %s26, 1
      %p107 = por %p105, %p106
      %p108 = scmp.ne.s32.totalorder %s99, %s100
      %p109 = scmp.eq.s32.totalorder %s26, 0
      %p110 = por %p108, %p109
      %p111 = scmp.ne.s32.totalorder %s99, %s100
      %p112 = scmp.eq.s32.totalorder %s27, 1
      %p113 = por %p111, %p112
      %p115 = scmp.ne.s32.totalorder %s100, %s114
      %p116 = scmp.eq.s32.totalorder %s27, 0
      %p117 = por %p115, %p116
      %s119 = sadd.s32 %s118, 1
      %p122 = scmp.eq.s32.totalorder %s21, 1
      %p123 = scmp.ne.s32.totalorder %s118, %s120
      %p124 = scmp.eq.s32.totalorder %s21, 0
      %p125 = por %p123, %p124
      %p126 = scmp.ne.s32.totalorder %s118, %s120
      %p127 = scmp.eq.s32.totalorder %s26, 1
      %p128 = por %p126, %p127
      %p129 = scmp.ne.s32.totalorder %s120, %s121
      %p130 = scmp.eq.s32.totalorder %s26, 0
      %p131 = por %p129, %p130
      %p132 = scmp.ne.s32.totalorder %s120, %s121
      %p133 = scmp.eq.s32.totalorder %s27, 1
      %p134 = por %p132, %p133
      %p136 = scmp.ne.s32.totalorder %s121, %s135
      %p137 = scmp.eq.s32.totalorder %s27, 0
      %p138 = por %p136, %p137
      %s140 = sadd.s32 %s139, 1
      %p143 = scmp.eq.s32.totalorder %s21, 1
      %p144 = scmp.ne.s32.totalorder %s139, %s141
      %p145 = scmp.eq.s32.totalorder %s21, 0
      %p146 = por %p144, %p145
      %p147 = scmp.ne.s32.totalorder %s139, %s141
      %p148 = scmp.eq.s32.totalorder %s26, 1
      %p149 = por %p147, %p148
      %p150 = scmp.ne.s32.totalorder %s141, %s142
      %p151 = scmp.eq.s32.totalorder %s26, 0
      %p152 = por %p150, %p151
      %p153 = scmp.ne.s32.totalorder %s141, %s142
      %p154 = scmp.eq.s32.totalorder %s27, 1
      %p155 = por %p153, %p154
      %p157 = scmp.ne.s32.totalorder %s142, %s156
      %p158 = scmp.eq.s32.totalorder %s27, 0
      %p159 = por %p157, %p158
      %s160 = ssub.s32 %s21, %s28
      %p161 = scmp.eq.s32.totalorder %s160, 0
      %s163 = sadd.s32 %s162, 1
      %s164 = scalar_select %p161, %s162, %s163
      %p167 = pneg %p161
      %p168 = scmp.eq.s32.totalorder %s21, 1
      %p169 = por %p167, %p168
      %p170 = scmp.ne.s32.totalorder %s162, %s165
      %p171 = scmp.eq.s32.totalorder %s21, 0
      %p172 = por %p170, %p171
      %p173 = scmp.ne.s32.totalorder %s162, %s165
      %p174 = scmp.eq.s32.totalorder %s26, 1
      %p175 = por %p173, %p174
      %p176 = scmp.ne.s32.totalorder %s165, %s166
      %p177 = scmp.eq.s32.totalorder %s26, 0
      %p178 = por %p176, %p177
      %p179 = scmp.ne.s32.totalorder %s165, %s166
      %p180 = scmp.eq.s32.totalorder %s27, 1
      %p181 = por %p179, %p180
      %p183 = scmp.ne.s32.totalorder %s166, %s182
      %p184 = scmp.eq.s32.totalorder %s27, 0
      %p185 = por %p183, %p184
      %p186 = scmp.le.s32.totalorder 1, %s21
      %p187 = scmp.lt.s32.totalorder %s21, 3
      %p188 = pnand %p186, %p187
      %p189 = pneg %p188
      // Predicated region
      $region9: #{tpu_custom_call.1} parent=5 // pred_check
        _
      $region10: #{tpu_custom_call.1} parent=5 // pred_check_branch
        %191 = sbr.rel (%p188) target = $region12
      $region11: #{tpu_custom_call.1} parent=5 // pred_region
        %s192 = ssub.s32 %s21, 1
        // Predicated region
        $region13: #{tpu_custom_call.1} parent=11 // pred_check
          %p193 = pneg %p68
        $region14: #{tpu_custom_call.1} parent=11 // pred_check_branch
          %195 = sbr.rel (%p193) target = $region16
        $region15: #{tpu_custom_call.1} parent=11 // pred_region
          %s197 = ssub.s32 512, 512
          %198 = vsyncadd [#allocation6], %s197
          %s199 = sshll.u32 [#allocation5], 4
          %s200 = int_to_ptr.vmem [resolvable:$true] %s199
          %205 = dma.hbm_to_vmem [thread:$0]  %s1, 512, %s200, [#allocation6], 128, 128, 8
        $region16: #{tpu_custom_call.1} parent=11 // pred_fallthru
          _
        // Predicated region
        $region17: #{tpu_custom_call.1} parent=11 // pred_check
          %p206 = pneg %p89
        $region18: #{tpu_custom_call.1} parent=11 // pred_check_branch
          %208 = sbr.rel (%p206) target = $region20
        $region19: #{tpu_custom_call.1} parent=11 // pred_region
          %s210 = ssub.s32 4096, 4096
          %211 = vsyncadd [#allocation6], %s210
          %s212 = sshll.u32 [#allocation7], 4
          %s213 = int_to_ptr.vmem [resolvable:$true] %s212
          %218 = dma.hbm_to_vmem [thread:$0]  %s2, 4096, %s213, [#allocation6], 128, 128, 8
        $region20: #{tpu_custom_call.1} parent=11 // pred_fallthru
          _
        // Predicated region
        $region21: #{tpu_custom_call.1} parent=11 // pred_check
          %p219 = pneg %p110
        $region22: #{tpu_custom_call.1} parent=11 // pred_check_branch
          %221 = sbr.rel (%p219) target = $region24
        $region23: #{tpu_custom_call.1} parent=11 // pred_region
          %s223 = ssub.s32 4096, 4096
          %224 = vsyncadd [#allocation9], %s223
          %s225 = sshll.u32 [#allocation8], 4
          %s226 = int_to_ptr.vmem [resolvable:$true] %s225
          %231 = dma.hbm_to_vmem [thread:$0]  %s3, 4096, %s226, [#allocation9], 128, 128, 8
        $region24: #{tpu_custom_call.1} parent=11 // pred_fallthru
          _
        // Predicated region
        $region25: #{tpu_custom_call.1} parent=11 // pred_check
          %p232 = pneg %p131
        $region26: #{tpu_custom_call.1} parent=11 // pred_check_branch
          %234 = sbr.rel (%p232) target = $region28
        $region27: #{tpu_custom_call.1} parent=11 // pred_region
          %s236 = ssub.s32 2048, 2048
          %237 = vsyncadd [#allocation9], %s236
          %s238 = sshll.u32 [#allocation10], 4
          %s239 = int_to_ptr.vmem [resolvable:$true] %s238
          %244 = dma.hbm_to_vmem [thread:$0]  %s4, 2048, %s239, [#allocation9], 64, 64, 4
        $region28: #{tpu_custom_call.1} parent=11 // pred_fallthru
          _
        // Predicated region
        $region29: #{tpu_custom_call.1} parent=11 // pred_check
          %p245 = pneg %p152
        $region30: #{tpu_custom_call.1} parent=11 // pred_check_branch
          %247 = sbr.rel (%p245) target = $region32
        $region31: #{tpu_custom_call.1} parent=11 // pred_region
          %s249 = ssub.s32 256, 256
          %250 = vsyncadd [#allocation12], %s249
          %s252 = sshll.u32 [#allocation11], 4
          %s253 = int_to_ptr.vmem [resolvable:$true] %s252
          %255 = dma.hbm_to_vmem [thread:$0]  %s5, 256, %s253, [#allocation12]
        $region32: #{tpu_custom_call.1} parent=11 // pred_fallthru
          _
      $region12: #{tpu_custom_call.1} parent=5 // pred_fallthru
        _
      %p256 = scmp.lt.s32.totalorder %s21, 2
      // Predicated region
      $region33: #{tpu_custom_call.1} parent=5 // pred_check
        %p257 = pneg %p256
      $region34: #{tpu_custom_call.1} parent=5 // pred_check_branch
        %259 = sbr.rel (%p257) target = $region36
      $region35: #{tpu_custom_call.1} parent=5 // pred_region
        // Predicated region
        $region37: #{tpu_custom_call.1} parent=35 // pred_check
          %p260 = pneg %p41
        $region38: #{tpu_custom_call.1} parent=35 // pred_check_branch
          %262 = sbr.rel (%p260) target = $region40
        $region39: #{tpu_custom_call.1} parent=35 // pred_region
          %s263 = sand.u32 %s31, 1
          %s264 = scalar_lea.sflag [#allocation3], %s263
          %s265 = sand.u32 %s31, 1
          %s266 = smul.addr %s265, 8
          %s267 = scalar_lea.vmem [#allocation2], %s266
          %s269 = ssub.s32 128, 128
          %270 = vsyncadd %s264, %s269
          %s271 = smul.addr %s21, 128
          %s272 = scalar_lea.hbm %s0, %s271
          %s274 = sshll.u32 %s267, 4
          %s275 = int_to_ptr.vmem [resolvable:$true] %s274
          %277 = dma.hbm_to_vmem [thread:$0]  %s272, 128, %s275, %s264
        $region40: #{tpu_custom_call.1} parent=35 // pred_fallthru
          _
      $region36: #{tpu_custom_call.1} parent=5 // pred_fallthru
        _
      %p278 = scmp.le.s32.totalorder 1, %s21
      %p279 = scmp.lt.s32.totalorder %s21, 3
      %p280 = pnand %p278, %p279
      %p281 = pneg %p280
      // Predicated region
      $region41: #{tpu_custom_call.1} parent=5 // pred_check
        _
      $region42: #{tpu_custom_call.1} parent=5 // pred_check_branch
        %283 = sbr.rel (%p280) target = $region44
      $region43: #{tpu_custom_call.1} parent=5 // pred_region
        %s284 = ssub.s32 %s21, 1
        %s285 = sand.u32 %s34, 1
        %s286 = scalar_lea.sflag [#allocation3], %s285
        %s287 = sand.u32 %s34, 1
        %s288 = smul.addr %s287, 8
        %s289 = scalar_lea.vmem [#allocation2], %s288
        // Predicated region
        $region45: #{tpu_custom_call.1} parent=43 // pred_check
          %p290 = pneg %p47
        $region46: #{tpu_custom_call.1} parent=43 // pred_check_branch
          %292 = sbr.rel (%p290) target = $region48
        $region47: #{tpu_custom_call.1} parent=43 // pred_region
          %293 = dma.done %s286, 128
        $region48: #{tpu_custom_call.1} parent=43 // pred_fallthru
          _
        // Predicated region
        $region49: #{tpu_custom_call.1} parent=43 // pred_check
          %p294 = pneg %p68
        $region50: #{tpu_custom_call.1} parent=43 // pred_check_branch
          %296 = sbr.rel (%p294) target = $region52
        $region51: #{tpu_custom_call.1} parent=43 // pred_region
          %297 = dma.done [#allocation6], 512
        $region52: #{tpu_custom_call.1} parent=43 // pred_fallthru
          _
        // Predicated region
        $region53: #{tpu_custom_call.1} parent=43 // pred_check
          %p298 = pneg %p89
        $region54: #{tpu_custom_call.1} parent=43 // pred_check_branch
          %300 = sbr.rel (%p298) target = $region56
        $region55: #{tpu_custom_call.1} parent=43 // pred_region
          %301 = dma.done [#allocation6], 4096
        $region56: #{tpu_custom_call.1} parent=43 // pred_fallthru
          _
        // Predicated region
        $region57: #{tpu_custom_call.1} parent=43 // pred_check
          %p302 = pneg %p110
        $region58: #{tpu_custom_call.1} parent=43 // pred_check_branch
          %304 = sbr.rel (%p302) target = $region60
        $region59: #{tpu_custom_call.1} parent=43 // pred_region
          %305 = dma.done [#allocation9], 4096
        $region60: #{tpu_custom_call.1} parent=43 // pred_fallthru
          _
        // Predicated region
        $region61: #{tpu_custom_call.1} parent=43 // pred_check
          %p306 = pneg %p131
        $region62: #{tpu_custom_call.1} parent=43 // pred_check_branch
          %308 = sbr.rel (%p306) target = $region64
        $region63: #{tpu_custom_call.1} parent=43 // pred_region
          %309 = dma.done [#allocation9], 2048
        $region64: #{tpu_custom_call.1} parent=43 // pred_fallthru
          _
        // Predicated region
        $region65: #{tpu_custom_call.1} parent=43 // pred_check
          %p310 = pneg %p152
        $region66: #{tpu_custom_call.1} parent=43 // pred_check_branch
          %312 = sbr.rel (%p310) target = $region68
        $region67: #{tpu_custom_call.1} parent=43 // pred_region
          %313 = dma.done [#allocation12], 256
        $region68: #{tpu_custom_call.1} parent=43 // pred_fallthru
          _
        %s314 = sand.u32 %s34, 1
        %s315 = scalar_lea.sflag [#allocation3], %s314
        %s316 = sand.u32 %s34, 1
        %s317 = smul.addr %s316, 8
        %s318 = scalar_lea.vmem [#allocation2], %s317
        %p319 = pneg %p47
        %p320 = pneg %p44
        %p321 = pneg %p68
        %p322 = pneg %p65
        %p323 = pneg %p89
        %p324 = pneg %p86
        %p325 = pneg %p110
        %p326 = pneg %p107
        %p327 = pneg %p131
        %p328 = pneg %p128
        %p329 = pneg %p152
        %p330 = pneg %p149
        %p331 = pneg %p178
        %p332 = pneg %p175
        %s333 = sand.u32 %s165, 1
        %s334 = scalar_lea.sflag [#allocation4], %s333
        %s335 = sand.u32 %s165, 1
        %s336 = smul.addr %s335, 8
        %s337 = scalar_lea.vmem [#allocation13], %s336
        %v339 = vld [vmem:[%s289] sm:$0xff]
        %v340 = vpack.c.bf16 %v339, %v339
        %v341 = vld [vmem:[#allocation11] sm:$0x3f]
        %v342 = vld [vmem:[#allocation11 + $0x8] sm:$0x3f]
        %v343 = vld [vmem:[#allocation5] sm:$0xff]
        %v344 = vld [vmem:[#allocation5 + $0x8] sm:$0xff]
        %v345 = vld [vmem:[#allocation5 + $0x10] sm:$0xff]
        %v346 = vld [vmem:[#allocation5 + $0x18] sm:$0xff]
        %v351 = vunpack.c.l.b16 %v343
        %v352 = vunpack.c.h.b16 %v343
        %v353 = vunpack.c.l.b16 %v344
        %v354 = vunpack.c.h.b16 %v344
        %v355 = vunpack.c.l.b16 %v345
        %v356 = vunpack.c.h.b16 %v345
        %v357 = vunpack.c.l.b16 %v346
        %v358 = vunpack.c.h.b16 %v346
        %v359 = vpack.c.b16 %v353, %v351
        %v360 = vpack.c.b16 %v354, %v352
        %v361 = vpack.c.b16 %v357, %v355
        %v362 = vpack.c.b16 %v358, %v356
        %vm367 = vcmask 261120
        %v369 = vsel %vm367, %v340, 0
        %371 = vmatprep.subr.bf16.mxu0 0
        %372 = vmatpush1.bf16.msra.mxu0 0
        %373 = vmatprep.subr.bf16.mxu0 0
        %374 = vmatpush1.bf16.msra.mxu0 0
        %375 = vmatprep.subr.bf16.mxu0 0
        %376 = vmatpush1.bf16.msra.mxu0 0
        %377 = vmatprep.subr.bf16.mxu0 0
        %378 = vmatpush1.bf16.msra.mxu0 0
        %379 = vmatprep.subr.bf16.mxu0 0
        %380 = vmatpush1.bf16.msra.mxu0 0
        %381 = vmatprep.subr.bf16.mxu0 0
        %382 = vmatpush1.bf16.msra.mxu0 0
        %383 = vmatprep.subr.bf16.mxu0 %v362
        %384 = vmatpush1.bf16.msra.mxu0 %v361
        %385 = vmatprep.subr.bf16.mxu0 %v360
        %386 = vmatpush1.bf16.msra.mxu0 %v359
        %387 = vmatprep.subr.bf16.mxu0 0
        %388 = vmatpush2.bf16.msra.mxu0 0
        %389 = vmatprep.subr.bf16.mxu0 0
        %390 = vmatpush2.bf16.msra.mxu0 0
        %391 = vmatprep.subr.bf16.mxu0 0
        %392 = vmatpush2.bf16.msra.mxu0 0
        %393 = vmatprep.subr.bf16.mxu0 0
        %394 = vmatpush2.bf16.msra.mxu0 0
        %395 = vmatprep.subr.bf16.mxu0 0
        %396 = vmatpush2.bf16.msra.mxu0 0
        %397 = vmatprep.subr.bf16.mxu0 0
        %398 = vmatpush2.bf16.msra.mxu0 0
        %399 = vmatprep.subr.bf16.mxu0 0
        %400 = vmatpush2.bf16.msra.mxu0 0
        %401 = vmatprep.subr.bf16.mxu0 0
        %402 = vmatpush2.bf16.msra.mxu0 0
        %403 = vmatprep.mubr.bf16.mxu0 0
        %404 = vmatmul.mubr.bf16.gmra.mxu0 %v369
        %v405 = vpop.f32.mrf.mxu0
        %v406 = vadd.f32 0.0, %v405
        %v407 = vpop.f32.mrf.mxu0
        %v408 = vadd.f32 0.0, %v407
        %v409 = vpop.f32.mrf.mxu0
        %v410 = vpop.f32.mrf.mxu0
        %411 = vdwg.mxu0
        %v412 = vrot.slane %v406, 4
        %v413 = vadd.f32 %v406, %v412
        %v414 = vrot.slane %v413, 2
        %v415 = vadd.f32 %v413, %v414
        %v416 = vrot.slane %v415, 1
        %v417 = vadd.f32 %v415, %v416
        %v418 = vrot.slane %v408, 4
        %v419 = vadd.f32 %v408, %v418
        %v420 = vrot.slane %v419, 2
        %v421 = vadd.f32 %v419, %v420
        %v422 = vrot.slane %v421, 1
        %v423 = vadd.f32 %v421, %v422
        %v424 = vrcp.pop 8.0
        %v425 = vmul.f32 %v417, %v424
        %v426 = vmul.f32 %v423, %v424
        %v427 = vmul.f32 %v406, %v406
        %v428 = vmul.f32 %v408, %v408
        %v429 = vrot.slane %v427, 4
        %v430 = vadd.f32 %v427, %v429
        %v431 = vrot.slane %v430, 2
        %v432 = vadd.f32 %v430, %v431
        %v433 = vrot.slane %v432, 1
        %v434 = vadd.f32 %v432, %v433
        %v435 = vrot.slane %v428, 4
        %v436 = vadd.f32 %v428, %v435
        %v437 = vrot.slane %v436, 2
        %v438 = vadd.f32 %v436, %v437
        %v439 = vrot.slane %v438, 1
        %v440 = vadd.f32 %v438, %v439
        %v441 = vmul.f32 %v434, %v424
        %v442 = vmul.f32 %v440, %v424
        %v443 = vmul.f32 %v425, %v425
        %v444 = vmul.f32 %v426, %v426
        %v445 = vsub.f32 %v441, %v443
        %v446 = vsub.f32 %v442, %v444
        %v447 = vadd.f32 %v445, 1e-05
        %v448 = vadd.f32 %v446, 1e-05
        %v449 = vrsqrt.pop %v447
        %v450 = vrsqrt.pop %v448
        %v451 = vmul.f32 %v341, %v449
        %v452 = vmul.f32 %v342, %v450
        %v453 = vmul.f32 %v425, %v451
        %v454 = vmul.f32 %v426, %v452
        %v457 = vrot.slane %v453, 7
        %v458 = vrot.slane %v454, 7
        %v461 = vsub.f32 %v341, %v457
        %v462 = vsub.f32 %v342, %v458
        %v463 = vlaneseq
        %v464 = vshrl.u32 %v463, 7
        %v465 = vsub.s32 0, %v464
        %v466 = vrot.slane %v451, %v465
        %v467 = vlaneseq
        %v468 = vshrl.u32 %v467, 7
        %v469 = vsub.s32 0, %v468
        %v470 = vrot.slane %v452, %v469
        %v471 = vmul.f32 %v406, %v466
        %v472 = vmul.f32 %v408, %v470
        %v473 = vlaneseq
        %v474 = vshrl.u32 %v473, 7
        %v475 = vsub.s32 1, %v474
        %v476 = vrot.slane %v461, %v475
        %v477 = vlaneseq
        %v478 = vshrl.u32 %v477, 7
        %v479 = vsub.s32 1, %v478
        %v480 = vrot.slane %v462, %v479
        %v481 = vadd.f32 %v471, %v476
        %v482 = vadd.f32 %v472, %v480
        %v483 = vmul.f32 %v481, 0.01
        %v484 = vmul.f32 %v482, 0.01
        %v485 = vmax.f32 %v481, %v483
        %v486 = vmax.f32 %v482, %v484
        %v487 = vpack.c.bf16 %v485, %v485
        %v488 = vpack.c.bf16 %v486, %v486
        %v489 = vld [vmem:[#allocation7] sm:$0xff]
        %v490 = vld [vmem:[#allocation7 + $0x8] sm:$0xff]
        %v491 = vld [vmem:[#allocation7 + $0x10] sm:$0xff]
        %v492 = vld [vmem:[#allocation7 + $0x18] sm:$0xff]
        %v493 = vld [vmem:[#allocation7 + $0x20] sm:$0xff]
        %v494 = vld [vmem:[#allocation7 + $0x28] sm:$0xff]
        %v495 = vld [vmem:[#allocation7 + $0x30] sm:$0xff]
        %v496 = vld [vmem:[#allocation7 + $0x38] sm:$0xff]
        %v497 = vld [vmem:[#allocation7 + $0x40] sm:$0xff]
        %v498 = vld [vmem:[#allocation7 + $0x48] sm:$0xff]
        %v499 = vld [vmem:[#allocation7 + $0x50] sm:$0xff]
        %v500 = vld [vmem:[#allocation7 + $0x58] sm:$0xff]
        %v501 = vld [vmem:[#allocation7 + $0x60] sm:$0xff]
        %v502 = vld [vmem:[#allocation7 + $0x68] sm:$0xff]
        %v503 = vld [vmem:[#allocation7 + $0x70] sm:$0xff]
        %v504 = vld [vmem:[#allocation7 + $0x78] sm:$0xff]
        %v505 = vld [vmem:[#allocation7 + $0x80] sm:$0xff]
        %v506 = vld [vmem:[#allocation7 + $0x88] sm:$0xff]
        %v507 = vld [vmem:[#allocation7 + $0x90] sm:$0xff]
        %v508 = vld [vmem:[#allocation7 + $0x98] sm:$0xff]
        %v509 = vld [vmem:[#allocation7 + $0xa0] sm:$0xff]
        %v510 = vld [vmem:[#allocation7 + $0xa8] sm:$0xff]
        %v511 = vld [vmem:[#allocation7 + $0xb0] sm:$0xff]
        %v512 = vld [vmem:[#allocation7 + $0xb8] sm:$0xff]
        %v513 = vld [vmem:[#allocation7 + $0xc0] sm:$0xff]
        %v514 = vld [vmem:[#allocation7 + $0xc8] sm:$0xff]
        %v515 = vld [vmem:[#allocation7 + $0xd0] sm:$0xff]
        %v516 = vld [vmem:[#allocation7 + $0xd8] sm:$0xff]
        %v517 = vld [vmem:[#allocation7 + $0xe0] sm:$0xff]
        %v518 = vld [vmem:[#allocation7 + $0xe8] sm:$0xff]
        %v519 = vld [vmem:[#allocation7 + $0xf0] sm:$0xff]
        %v520 = vld [vmem:[#allocation7 + $0xf8] sm:$0xff]
        %v553 = vunpack.c.l.b16 %v489
        %v554 = vunpack.c.h.b16 %v489
        %v555 = vunpack.c.l.b16 %v490
        %v556 = vunpack.c.h.b16 %v490
        %v557 = vunpack.c.l.b16 %v491
        %v558 = vunpack.c.h.b16 %v491
        %v559 = vunpack.c.l.b16 %v492
        %v560 = vunpack.c.h.b16 %v492
        %v561 = vunpack.c.l.b16 %v493
        %v562 = vunpack.c.h.b16 %v493
        %v563 = vunpack.c.l.b16 %v494
        %v564 = vunpack.c.h.b16 %v494
        %v565 = vunpack.c.l.b16 %v495
        %v566 = vunpack.c.h.b16 %v495
        %v567 = vunpack.c.l.b16 %v496
        %v568 = vunpack.c.h.b16 %v496
        %v569 = vunpack.c.l.b16 %v497
        %v570 = vunpack.c.h.b16 %v497
        %v571 = vunpack.c.l.b16 %v498
        %v572 = vunpack.c.h.b16 %v498
        %v573 = vunpack.c.l.b16 %v499
        %v574 = vunpack.c.h.b16 %v499
        %v575 = vunpack.c.l.b16 %v500
        %v576 = vunpack.c.h.b16 %v500
        %v577 = vunpack.c.l.b16 %v501
        %v578 = vunpack.c.h.b16 %v501
        %v579 = vunpack.c.l.b16 %v502
        %v580 = vunpack.c.h.b16 %v502
        %v581 = vunpack.c.l.b16 %v503
        %v582 = vunpack.c.h.b16 %v503
        %v583 = vunpack.c.l.b16 %v504
        %v584 = vunpack.c.h.b16 %v504
        %v585 = vunpack.c.l.b16 %v505
        %v586 = vunpack.c.h.b16 %v505
        %v587 = vunpack.c.l.b16 %v506
        %v588 = vunpack.c.h.b16 %v506
        %v589 = vunpack.c.l.b16 %v507
        %v590 = vunpack.c.h.b16 %v507
        %v591 = vunpack.c.l.b16 %v508
        %v592 = vunpack.c.h.b16 %v508
        %v593 = vunpack.c.l.b16 %v509
        %v594 = vunpack.c.h.b16 %v509
        %v595 = vunpack.c.l.b16 %v510
        %v596 = vunpack.c.h.b16 %v510
        %v597 = vunpack.c.l.b16 %v511
        %v598 = vunpack.c.h.b16 %v511
        %v599 = vunpack.c.l.b16 %v512
        %v600 = vunpack.c.h.b16 %v512
        %v601 = vunpack.c.l.b16 %v513
        %v602 = vunpack.c.h.b16 %v513
        %v603 = vunpack.c.l.b16 %v514
        %v604 = vunpack.c.h.b16 %v514
        %v605 = vunpack.c.l.b16 %v515
        %v606 = vunpack.c.h.b16 %v515
        %v607 = vunpack.c.l.b16 %v516
        %v608 = vunpack.c.h.b16 %v516
        %v609 = vunpack.c.l.b16 %v517
        %v610 = vunpack.c.h.b16 %v517
        %v611 = vunpack.c.l.b16 %v518
        %v612 = vunpack.c.h.b16 %v518
        %v613 = vunpack.c.l.b16 %v519
        %v614 = vunpack.c.h.b16 %v519
        %v615 = vunpack.c.l.b16 %v520
        %v616 = vunpack.c.h.b16 %v520
        %v617 = vpack.c.b16 %v555, %v553
        %v618 = vpack.c.b16 %v556, %v554
        %v619 = vpack.c.b16 %v559, %v557
        %v620 = vpack.c.b16 %v560, %v558
        %v621 = vpack.c.b16 %v563, %v561
        %v622 = vpack.c.b16 %v564, %v562
        %v623 = vpack.c.b16 %v567, %v565
        %v624 = vpack.c.b16 %v568, %v566
        %v625 = vpack.c.b16 %v571, %v569
        %v626 = vpack.c.b16 %v572, %v570
        %v627 = vpack.c.b16 %v575, %v573
        %v628 = vpack.c.b16 %v576, %v574
        %v629 = vpack.c.b16 %v579, %v577
        %v630 = vpack.c.b16 %v580, %v578
        %v631 = vpack.c.b16 %v583, %v581
        %v632 = vpack.c.b16 %v584, %v582
        %v633 = vpack.c.b16 %v587, %v585
        %v634 = vpack.c.b16 %v588, %v586
        %v635 = vpack.c.b16 %v591, %v589
        %v636 = vpack.c.b16 %v592, %v590
        %v637 = vpack.c.b16 %v595, %v593
        %v638 = vpack.c.b16 %v596, %v594
        %v639 = vpack.c.b16 %v599, %v597
        %v640 = vpack.c.b16 %v600, %v598
        %v641 = vpack.c.b16 %v603, %v601
        %v642 = vpack.c.b16 %v604, %v602
        %v643 = vpack.c.b16 %v607, %v605
        %v644 = vpack.c.b16 %v608, %v606
        %v645 = vpack.c.b16 %v611, %v609
        %v646 = vpack.c.b16 %v612, %v610
        %v647 = vpack.c.b16 %v615, %v613
        %v648 = vpack.c.b16 %v616, %v614
        %681 = vmatprep.subr.bf16.mxu0 %v632
        %682 = vmatpush1.bf16.msra.mxu0 %v631
        %683 = vmatprep.subr.bf16.mxu0 %v630
        %684 = vmatpush1.bf16.msra.mxu0 %v629
        %685 = vmatprep.subr.bf16.mxu0 %v628
        %686 = vmatpush1.bf16.msra.mxu0 %v627
        %687 = vmatprep.subr.bf16.mxu0 %v626
        %688 = vmatpush1.bf16.msra.mxu0 %v625
        %689 = vmatprep.subr.bf16.mxu0 %v624
        %690 = vmatpush1.bf16.msra.mxu0 %v623
        %691 = vmatprep.subr.bf16.mxu0 %v622
        %692 = vmatpush1.bf16.msra.mxu0 %v621
        %693 = vmatprep.subr.bf16.mxu0 %v620
        %694 = vmatpush1.bf16.msra.mxu0 %v619
        %695 = vmatprep.subr.bf16.mxu0 %v618
        %696 = vmatpush1.bf16.msra.mxu0 %v617
        %697 = vmatprep.subr.bf16.mxu0 %v648
        %698 = vmatpush2.bf16.msra.mxu0 %v647
        %699 = vmatprep.subr.bf16.mxu0 %v646
        %700 = vmatpush2.bf16.msra.mxu0 %v645
        %701 = vmatprep.subr.bf16.mxu0 %v644
        %702 = vmatpush2.bf16.msra.mxu0 %v643
        %703 = vmatprep.subr.bf16.mxu0 %v642
        %704 = vmatpush2.bf16.msra.mxu0 %v641
        %705 = vmatprep.subr.bf16.mxu0 %v640
        %706 = vmatpush2.bf16.msra.mxu0 %v639
        %707 = vmatprep.subr.bf16.mxu0 %v638
        %708 = vmatpush2.bf16.msra.mxu0 %v637
        %709 = vmatprep.subr.bf16.mxu0 %v636
        %710 = vmatpush2.bf16.msra.mxu0 %v635
        %711 = vmatprep.subr.bf16.mxu0 %v634
        %712 = vmatpush2.bf16.msra.mxu0 %v633
        %713 = vmatprep.mubr.bf16.mxu0 %v488
        %714 = vmatmul.mubr.bf16.gmra.mxu0 %v487
        %v715 = vpop.f32.mrf.mxu0
        %v716 = vadd.f32 0.0, %v715
        %v717 = vpop.f32.mrf.mxu0
        %v718 = vadd.f32 0.0, %v717
        %v719 = vpop.f32.mrf.mxu0
        %v720 = vpop.f32.mrf.mxu0
        %721 = vdwg.mxu0
        %v722 = vrot.slane %v716, 4
        %v723 = vadd.f32 %v716, %v722
        %v724 = vrot.slane %v723, 2
        %v725 = vadd.f32 %v723, %v724
        %v726 = vrot.slane %v725, 1
        %v727 = vadd.f32 %v725, %v726
        %v728 = vrot.slane %v718, 4
        %v729 = vadd.f32 %v718, %v728
        %v730 = vrot.slane %v729, 2
        %v731 = vadd.f32 %v729, %v730
        %v732 = vrot.slane %v731, 1
        %v733 = vadd.f32 %v731, %v732
        %v734 = vmul.f32 %v727, %v424
        %v735 = vmul.f32 %v733, %v424
        %v736 = vmul.f32 %v716, %v716
        %v737 = vmul.f32 %v718, %v718
        %v738 = vrot.slane %v736, 4
        %v739 = vadd.f32 %v736, %v738
        %v740 = vrot.slane %v739, 2
        %v741 = vadd.f32 %v739, %v740
        %v742 = vrot.slane %v741, 1
        %v743 = vadd.f32 %v741, %v742
        %v744 = vrot.slane %v737, 4
        %v745 = vadd.f32 %v737, %v744
        %v746 = vrot.slane %v745, 2
        %v747 = vadd.f32 %v745, %v746
        %v748 = vrot.slane %v747, 1
        %v749 = vadd.f32 %v747, %v748
        %v750 = vmul.f32 %v743, %v424
        %v751 = vmul.f32 %v749, %v424
        %v752 = vmul.f32 %v734, %v734
        %v753 = vmul.f32 %v735, %v735
        %v754 = vsub.f32 %v750, %v752
        %v755 = vsub.f32 %v751, %v753
        %v756 = vadd.f32 %v754, 1e-05
        %v757 = vadd.f32 %v755, 1e-05
        %v758 = vrsqrt.pop %v756
        %v759 = vrsqrt.pop %v757
        %v760 = vmul.f32 %v341, %v758
        %v761 = vmul.f32 %v342, %v759
        %v762 = vmul.f32 %v734, %v760
        %v763 = vmul.f32 %v735, %v761
        %v766 = vrot.slane %v762, 7
        %v767 = vrot.slane %v763, 7
        %v770 = vsub.f32 %v341, %v766
        %v771 = vsub.f32 %v342, %v767
        %v772 = vlaneseq
        %v773 = vshrl.u32 %v772, 7
        %v774 = vsub.s32 2, %v773
        %v775 = vrot.slane %v760, %v774
        %v776 = vlaneseq
        %v777 = vshrl.u32 %v776, 7
        %v778 = vsub.s32 2, %v777
        %v779 = vrot.slane %v761, %v778
        %v780 = vmul.f32 %v716, %v775
        %v781 = vmul.f32 %v718, %v779
        %v782 = vlaneseq
        %v783 = vshrl.u32 %v782, 7
        %v784 = vsub.s32 3, %v783
        %v785 = vrot.slane %v770, %v784
        %v786 = vlaneseq
        %v787 = vshrl.u32 %v786, 7
        %v788 = vsub.s32 3, %v787
        %v789 = vrot.slane %v771, %v788
        %v790 = vadd.f32 %v780, %v785
        %v791 = vadd.f32 %v781, %v789
        %v792 = vmul.f32 %v790, 0.01
        %v793 = vmul.f32 %v791, 0.01
        %v794 = vmax.f32 %v790, %v792
        %v795 = vmax.f32 %v791, %v793
        %v796 = vpack.c.bf16 %v794, %v794
        %v797 = vpack.c.bf16 %v795, %v795
        %v798 = vld [vmem:[#allocation8] sm:$0xff]
        %v799 = vld [vmem:[#allocation8 + $0x8] sm:$0xff]
        %v800 = vld [vmem:[#allocation8 + $0x10] sm:$0xff]
        %v801 = vld [vmem:[#allocation8 + $0x18] sm:$0xff]
        %v802 = vld [vmem:[#allocation8 + $0x20] sm:$0xff]
        %v803 = vld [vmem:[#allocation8 + $0x28] sm:$0xff]
        %v804 = vld [vmem:[#allocation8 + $0x30] sm:$0xff]
        %v805 = vld [vmem:[#allocation8 + $0x38] sm:$0xff]
        %v806 = vld [vmem:[#allocation8 + $0x40] sm:$0xff]
        %v807 = vld [vmem:[#allocation8 + $0x48] sm:$0xff]
        %v808 = vld [vmem:[#allocation8 + $0x50] sm:$0xff]
        %v809 = vld [vmem:[#allocation8 + $0x58] sm:$0xff]
        %v810 = vld [vmem:[#allocation8 + $0x60] sm:$0xff]
        %v811 = vld [vmem:[#allocation8 + $0x68] sm:$0xff]
        %v812 = vld [vmem:[#allocation8 + $0x70] sm:$0xff]
        %v813 = vld [vmem:[#allocation8 + $0x78] sm:$0xff]
        %v814 = vld [vmem:[#allocation8 + $0x80] sm:$0xff]
        %v815 = vld [vmem:[#allocation8 + $0x88] sm:$0xff]
        %v816 = vld [vmem:[#allocation8 + $0x90] sm:$0xff]
        %v817 = vld [vmem:[#allocation8 + $0x98] sm:$0xff]
        %v818 = vld [vmem:[#allocation8 + $0xa0] sm:$0xff]
        %v819 = vld [vmem:[#allocation8 + $0xa8] sm:$0xff]
        %v820 = vld [vmem:[#allocation8 + $0xb0] sm:$0xff]
        %v821 = vld [vmem:[#allocation8 + $0xb8] sm:$0xff]
        %v822 = vld [vmem:[#allocation8 + $0xc0] sm:$0xff]
        %v823 = vld [vmem:[#allocation8 + $0xc8] sm:$0xff]
        %v824 = vld [vmem:[#allocation8 + $0xd0] sm:$0xff]
        %v825 = vld [vmem:[#allocation8 + $0xd8] sm:$0xff]
        %v826 = vld [vmem:[#allocation8 + $0xe0] sm:$0xff]
        %v827 = vld [vmem:[#allocation8 + $0xe8] sm:$0xff]
        %v828 = vld [vmem:[#allocation8 + $0xf0] sm:$0xff]
        %v829 = vld [vmem:[#allocation8 + $0xf8] sm:$0xff]
        %v862 = vunpack.c.l.b16 %v798
        %v863 = vunpack.c.h.b16 %v798
        %v864 = vunpack.c.l.b16 %v799
        %v865 = vunpack.c.h.b16 %v799
        %v866 = vunpack.c.l.b16 %v800
        %v867 = vunpack.c.h.b16 %v800
        %v868 = vunpack.c.l.b16 %v801
        %v869 = vunpack.c.h.b16 %v801
        %v870 = vunpack.c.l.b16 %v802
        %v871 = vunpack.c.h.b16 %v802
        %v872 = vunpack.c.l.b16 %v803
        %v873 = vunpack.c.h.b16 %v803
        %v874 = vunpack.c.l.b16 %v804
        %v875 = vunpack.c.h.b16 %v804
        %v876 = vunpack.c.l.b16 %v805
        %v877 = vunpack.c.h.b16 %v805
        %v878 = vunpack.c.l.b16 %v806
        %v879 = vunpack.c.h.b16 %v806
        %v880 = vunpack.c.l.b16 %v807
        %v881 = vunpack.c.h.b16 %v807
        %v882 = vunpack.c.l.b16 %v808
        %v883 = vunpack.c.h.b16 %v808
        %v884 = vunpack.c.l.b16 %v809
        %v885 = vunpack.c.h.b16 %v809
        %v886 = vunpack.c.l.b16 %v810
        %v887 = vunpack.c.h.b16 %v810
        %v888 = vunpack.c.l.b16 %v811
        %v889 = vunpack.c.h.b16 %v811
        %v890 = vunpack.c.l.b16 %v812
        %v891 = vunpack.c.h.b16 %v812
        %v892 = vunpack.c.l.b16 %v813
        %v893 = vunpack.c.h.b16 %v813
        %v894 = vunpack.c.l.b16 %v814
        %v895 = vunpack.c.h.b16 %v814
        %v896 = vunpack.c.l.b16 %v815
        %v897 = vunpack.c.h.b16 %v815
        %v898 = vunpack.c.l.b16 %v816
        %v899 = vunpack.c.h.b16 %v816
        %v900 = vunpack.c.l.b16 %v817
        %v901 = vunpack.c.h.b16 %v817
        %v902 = vunpack.c.l.b16 %v818
        %v903 = vunpack.c.h.b16 %v818
        %v904 = vunpack.c.l.b16 %v819
        %v905 = vunpack.c.h.b16 %v819
        %v906 = vunpack.c.l.b16 %v820
        %v907 = vunpack.c.h.b16 %v820
        %v908 = vunpack.c.l.b16 %v821
        %v909 = vunpack.c.h.b16 %v821
        %v910 = vunpack.c.l.b16 %v822
        %v911 = vunpack.c.h.b16 %v822
        %v912 = vunpack.c.l.b16 %v823
        %v913 = vunpack.c.h.b16 %v823
        %v914 = vunpack.c.l.b16 %v824
        %v915 = vunpack.c.h.b16 %v824
        %v916 = vunpack.c.l.b16 %v825
        %v917 = vunpack.c.h.b16 %v825
        %v918 = vunpack.c.l.b16 %v826
        %v919 = vunpack.c.h.b16 %v826
        %v920 = vunpack.c.l.b16 %v827
        %v921 = vunpack.c.h.b16 %v827
        %v922 = vunpack.c.l.b16 %v828
        %v923 = vunpack.c.h.b16 %v828
        %v924 = vunpack.c.l.b16 %v829
        %v925 = vunpack.c.h.b16 %v829
        %v926 = vpack.c.b16 %v864, %v862
        %v927 = vpack.c.b16 %v865, %v863
        %v928 = vpack.c.b16 %v868, %v866
        %v929 = vpack.c.b16 %v869, %v867
        %v930 = vpack.c.b16 %v872, %v870
        %v931 = vpack.c.b16 %v873, %v871
        %v932 = vpack.c.b16 %v876, %v874
        %v933 = vpack.c.b16 %v877, %v875
        %v934 = vpack.c.b16 %v880, %v878
        %v935 = vpack.c.b16 %v881, %v879
        %v936 = vpack.c.b16 %v884, %v882
        %v937 = vpack.c.b16 %v885, %v883
        %v938 = vpack.c.b16 %v888, %v886
        %v939 = vpack.c.b16 %v889, %v887
        %v940 = vpack.c.b16 %v892, %v890
        %v941 = vpack.c.b16 %v893, %v891
        %v942 = vpack.c.b16 %v896, %v894
        %v943 = vpack.c.b16 %v897, %v895
        %v944 = vpack.c.b16 %v900, %v898
        %v945 = vpack.c.b16 %v901, %v899
        %v946 = vpack.c.b16 %v904, %v902
        %v947 = vpack.c.b16 %v905, %v903
        %v948 = vpack.c.b16 %v908, %v906
        %v949 = vpack.c.b16 %v909, %v907
        %v950 = vpack.c.b16 %v912, %v910
        %v951 = vpack.c.b16 %v913, %v911
        %v952 = vpack.c.b16 %v916, %v914
        %v953 = vpack.c.b16 %v917, %v915
        %v954 = vpack.c.b16 %v920, %v918
        %v955 = vpack.c.b16 %v921, %v919
        %v956 = vpack.c.b16 %v924, %v922
        %v957 = vpack.c.b16 %v925, %v923
        %990 = vmatprep.subr.bf16.mxu0 %v941
        %991 = vmatpush1.bf16.msra.mxu0 %v940
        %992 = vmatprep.subr.bf16.mxu0 %v939
        %993 = vmatpush1.bf16.msra.mxu0 %v938
        %994 = vmatprep.subr.bf16.mxu0 %v937
        %995 = vmatpush1.bf16.msra.mxu0 %v936
        %996 = vmatprep.subr.bf16.mxu0 %v935
        %997 = vmatpush1.bf16.msra.mxu0 %v934
        %998 = vmatprep.subr.bf16.mxu0 %v933
        %999 = vmatpush1.bf16.msra.mxu0 %v932
        %1000 = vmatprep.subr.bf16.mxu0 %v931
        %1001 = vmatpush1.bf16.msra.mxu0 %v930
        %1002 = vmatprep.subr.bf16.mxu0 %v929
        %1003 = vmatpush1.bf16.msra.mxu0 %v928
        %1004 = vmatprep.subr.bf16.mxu0 %v927
        %1005 = vmatpush1.bf16.msra.mxu0 %v926
        %1006 = vmatprep.subr.bf16.mxu0 %v957
        %1007 = vmatpush2.bf16.msra.mxu0 %v956
        %1008 = vmatprep.subr.bf16.mxu0 %v955
        %1009 = vmatpush2.bf16.msra.mxu0 %v954
        %1010 = vmatprep.subr.bf16.mxu0 %v953
        %1011 = vmatpush2.bf16.msra.mxu0 %v952
        %1012 = vmatprep.subr.bf16.mxu0 %v951
        %1013 = vmatpush2.bf16.msra.mxu0 %v950
        %1014 = vmatprep.subr.bf16.mxu0 %v949
        %1015 = vmatpush2.bf16.msra.mxu0 %v948
        %1016 = vmatprep.subr.bf16.mxu0 %v947
        %1017 = vmatpush2.bf16.msra.mxu0 %v946
        %1018 = vmatprep.subr.bf16.mxu0 %v945
        %1019 = vmatpush2.bf16.msra.mxu0 %v944
        %1020 = vmatprep.subr.bf16.mxu0 %v943
        %1021 = vmatpush2.bf16.msra.mxu0 %v942
        %1022 = vmatprep.mubr.bf16.mxu0 %v797
        %1023 = vmatmul.mubr.bf16.gmra.mxu0 %v796
        %v1024 = vpop.f32.mrf.mxu0
        %v1025 = vadd.f32 0.0, %v1024
        %v1026 = vpop.f32.mrf.mxu0
        %v1027 = vadd.f32 0.0, %v1026
        %v1028 = vpop.f32.mrf.mxu0
        %v1029 = vpop.f32.mrf.mxu0
        %1030 = vdwg.mxu0
        %v1031 = vrot.slane %v1025, 4
        %v1032 = vadd.f32 %v1025, %v1031
        %v1033 = vrot.slane %v1032, 2
        %v1034 = vadd.f32 %v1032, %v1033
        %v1035 = vrot.slane %v1034, 1
        %v1036 = vadd.f32 %v1034, %v1035
        %v1037 = vrot.slane %v1027, 4
        %v1038 = vadd.f32 %v1027, %v1037
        %v1039 = vrot.slane %v1038, 2
        %v1040 = vadd.f32 %v1038, %v1039
        %v1041 = vrot.slane %v1040, 1
        %v1042 = vadd.f32 %v1040, %v1041
        %v1043 = vmul.f32 %v1036, %v424
        %v1044 = vmul.f32 %v1042, %v424
        %v1045 = vmul.f32 %v1025, %v1025
        %v1046 = vmul.f32 %v1027, %v1027
        %v1047 = vrot.slane %v1045, 4
        %v1048 = vadd.f32 %v1045, %v1047
        %v1049 = vrot.slane %v1048, 2
        %v1050 = vadd.f32 %v1048, %v1049
        %v1051 = vrot.slane %v1050, 1
        %v1052 = vadd.f32 %v1050, %v1051
        %v1053 = vrot.slane %v1046, 4
        %v1054 = vadd.f32 %v1046, %v1053
        %v1055 = vrot.slane %v1054, 2
        %v1056 = vadd.f32 %v1054, %v1055
        %v1057 = vrot.slane %v1056, 1
        %v1058 = vadd.f32 %v1056, %v1057
        %v1059 = vmul.f32 %v1052, %v424
        %v1060 = vmul.f32 %v1058, %v424
        %v1061 = vmul.f32 %v1043, %v1043
        %v1062 = vmul.f32 %v1044, %v1044
        %v1063 = vsub.f32 %v1059, %v1061
        %v1064 = vsub.f32 %v1060, %v1062
        %v1065 = vadd.f32 %v1063, 1e-05
        %v1066 = vadd.f32 %v1064, 1e-05
        %v1067 = vrsqrt.pop %v1065
        %v1068 = vrsqrt.pop %v1066
        %v1069 = vmul.f32 %v341, %v1067
        %v1070 = vmul.f32 %v342, %v1068
        %v1071 = vmul.f32 %v1043, %v1069
        %v1072 = vmul.f32 %v1044, %v1070
        %v1075 = vrot.slane %v1071, 7
        %v1076 = vrot.slane %v1072, 7
        %v1079 = vsub.f32 %v341, %v1075
        %v1080 = vsub.f32 %v342, %v1076
        %v1081 = vlaneseq
        %v1082 = vshrl.u32 %v1081, 7
        %v1083 = vsub.s32 4, %v1082
        %v1084 = vrot.slane %v1069, %v1083
        %v1085 = vlaneseq
        %v1086 = vshrl.u32 %v1085, 7
        %v1087 = vsub.s32 4, %v1086
        %v1088 = vrot.slane %v1070, %v1087
        %v1089 = vmul.f32 %v1025, %v1084
        %v1090 = vmul.f32 %v1027, %v1088
        %v1091 = vlaneseq
        %v1092 = vshrl.u32 %v1091, 7
        %v1093 = vsub.s32 5, %v1092
        %v1094 = vrot.slane %v1079, %v1093
        %v1095 = vlaneseq
        %v1096 = vshrl.u32 %v1095, 7
        %v1097 = vsub.s32 5, %v1096
        %v1098 = vrot.slane %v1080, %v1097
        %v1099 = vadd.f32 %v1089, %v1094
        %v1100 = vadd.f32 %v1090, %v1098
        %v1101 = vmul.f32 %v1099, 0.01
        %v1102 = vmul.f32 %v1100, 0.01
        %v1103 = vmax.f32 %v1099, %v1101
        %v1104 = vmax.f32 %v1100, %v1102
        %v1105 = vpack.c.bf16 %v1103, %v1103
        %v1106 = vpack.c.bf16 %v1104, %v1104
        %v1107 = vld [vmem:[#allocation10] sm:$0xf]
        %v1108 = vld [vmem:[#allocation10 + $0x4] sm:$0xf]
        %v1109 = vld [vmem:[#allocation10 + $0x8] sm:$0xf]
        %v1110 = vld [vmem:[#allocation10 + $0xc] sm:$0xf]
        %v1111 = vld [vmem:[#allocation10 + $0x10] sm:$0xf]
        %v1112 = vld [vmem:[#allocation10 + $0x14] sm:$0xf]
        %v1113 = vld [vmem:[#allocation10 + $0x18] sm:$0xf]
        %v1114 = vld [vmem:[#allocation10 + $0x1c] sm:$0xf]
        %v1115 = vld [vmem:[#allocation10 + $0x20] sm:$0xf]
        %v1116 = vld [vmem:[#allocation10 + $0x24] sm:$0xf]
        %v1117 = vld [vmem:[#allocation10 + $0x28] sm:$0xf]
        %v1118 = vld [vmem:[#allocation10 + $0x2c] sm:$0xf]
        %v1119 = vld [vmem:[#allocation10 + $0x30] sm:$0xf]
        %v1120 = vld [vmem:[#allocation10 + $0x34] sm:$0xf]
        %v1121 = vld [vmem:[#allocation10 + $0x38] sm:$0xf]
        %v1122 = vld [vmem:[#allocation10 + $0x3c] sm:$0xf]
        %v1123 = vld [vmem:[#allocation10 + $0x40] sm:$0xf]
        %v1124 = vld [vmem:[#allocation10 + $0x44] sm:$0xf]
        %v1125 = vld [vmem:[#allocation10 + $0x48] sm:$0xf]
        %v1126 = vld [vmem:[#allocation10 + $0x4c] sm:$0xf]
        %v1127 = vld [vmem:[#allocation10 + $0x50] sm:$0xf]
        %v1128 = vld [vmem:[#allocation10 + $0x54] sm:$0xf]
        %v1129 = vld [vmem:[#allocation10 + $0x58] sm:$0xf]
        %v1130 = vld [vmem:[#allocation10 + $0x5c] sm:$0xf]
        %v1131 = vld [vmem:[#allocation10 + $0x60] sm:$0xf]
        %v1132 = vld [vmem:[#allocation10 + $0x64] sm:$0xf]
        %v1133 = vld [vmem:[#allocation10 + $0x68] sm:$0xf]
        %v1134 = vld [vmem:[#allocation10 + $0x6c] sm:$0xf]
        %v1135 = vld [vmem:[#allocation10 + $0x70] sm:$0xf]
        %v1136 = vld [vmem:[#allocation10 + $0x74] sm:$0xf]
        %v1137 = vld [vmem:[#allocation10 + $0x78] sm:$0xf]
        %v1138 = vld [vmem:[#allocation10 + $0x7c] sm:$0xf]
        %v1171 = vunpack.c.l.b16 %v1107
        %v1172 = vunpack.c.l.b16 %v1108
        %v1173 = vunpack.c.l.b16 %v1109
        %v1174 = vunpack.c.l.b16 %v1110
        %v1175 = vunpack.c.l.b16 %v1111
        %v1176 = vunpack.c.l.b16 %v1112
        %v1177 = vunpack.c.l.b16 %v1113
        %v1178 = vunpack.c.l.b16 %v1114
        %v1179 = vunpack.c.l.b16 %v1115
        %v1180 = vunpack.c.l.b16 %v1116
        %v1181 = vunpack.c.l.b16 %v1117
        %v1182 = vunpack.c.l.b16 %v1118
        %v1183 = vunpack.c.l.b16 %v1119
        %v1184 = vunpack.c.l.b16 %v1120
        %v1185 = vunpack.c.l.b16 %v1121
        %v1186 = vunpack.c.l.b16 %v1122
        %v1187 = vunpack.c.l.b16 %v1123
        %v1188 = vunpack.c.l.b16 %v1124
        %v1189 = vunpack.c.l.b16 %v1125
        %v1190 = vunpack.c.l.b16 %v1126
        %v1191 = vunpack.c.l.b16 %v1127
        %v1192 = vunpack.c.l.b16 %v1128
        %v1193 = vunpack.c.l.b16 %v1129
        %v1194 = vunpack.c.l.b16 %v1130
        %v1195 = vunpack.c.l.b16 %v1131
        %v1196 = vunpack.c.l.b16 %v1132
        %v1197 = vunpack.c.l.b16 %v1133
        %v1198 = vunpack.c.l.b16 %v1134
        %v1199 = vunpack.c.l.b16 %v1135
        %v1200 = vunpack.c.l.b16 %v1136
        %v1201 = vunpack.c.l.b16 %v1137
        %v1202 = vunpack.c.l.b16 %v1138
        %v1203 = vpack.c.b16 %v1172, %v1171
        %v1204 = vpack.c.b16 %v1174, %v1173
        %v1205 = vpack.c.b16 %v1176, %v1175
        %v1206 = vpack.c.b16 %v1178, %v1177
        %v1207 = vpack.c.b16 %v1180, %v1179
        %v1208 = vpack.c.b16 %v1182, %v1181
        %v1209 = vpack.c.b16 %v1184, %v1183
        %v1210 = vpack.c.b16 %v1186, %v1185
        %v1211 = vpack.c.b16 %v1188, %v1187
        %v1212 = vpack.c.b16 %v1190, %v1189
        %v1213 = vpack.c.b16 %v1192, %v1191
        %v1214 = vpack.c.b16 %v1194, %v1193
        %v1215 = vpack.c.b16 %v1196, %v1195
        %v1216 = vpack.c.b16 %v1198, %v1197
        %v1217 = vpack.c.b16 %v1200, %v1199
        %v1218 = vpack.c.b16 %v1202, %v1201
        %1235 = vmatprep.subr.bf16.mxu0 0
        %1236 = vmatpush1.bf16.msra.mxu0 %v1210
        %1237 = vmatprep.subr.bf16.mxu0 0
        %1238 = vmatpush1.bf16.msra.mxu0 %v1209
        %1239 = vmatprep.subr.bf16.mxu0 0
        %1240 = vmatpush1.bf16.msra.mxu0 %v1208
        %1241 = vmatprep.subr.bf16.mxu0 0
        %1242 = vmatpush1.bf16.msra.mxu0 %v1207
        %1243 = vmatprep.subr.bf16.mxu0 0
        %1244 = vmatpush1.bf16.msra.mxu0 %v1206
        %1245 = vmatprep.subr.bf16.mxu0 0
        %1246 = vmatpush1.bf16.msra.mxu0 %v1205
        %1247 = vmatprep.subr.bf16.mxu0 0
        %1248 = vmatpush1.bf16.msra.mxu0 %v1204
        %1249 = vmatprep.subr.bf16.mxu0 0
        %1250 = vmatpush1.bf16.msra.mxu0 %v1203
        %1251 = vmatprep.subr.bf16.mxu0 0
        %1252 = vmatpush2.bf16.msra.mxu0 %v1218
        %1253 = vmatprep.subr.bf16.mxu0 0
        %1254 = vmatpush2.bf16.msra.mxu0 %v1217
        %1255 = vmatprep.subr.bf16.mxu0 0
        %1256 = vmatpush2.bf16.msra.mxu0 %v1216
        %1257 = vmatprep.subr.bf16.mxu0 0
        %1258 = vmatpush2.bf16.msra.mxu0 %v1215
        %1259 = vmatprep.subr.bf16.mxu0 0
        %1260 = vmatpush2.bf16.msra.mxu0 %v1214
        %1261 = vmatprep.subr.bf16.mxu0 0
        %1262 = vmatpush2.bf16.msra.mxu0 %v1213
        %1263 = vmatprep.subr.bf16.mxu0 0
        %1264 = vmatpush2.bf16.msra.mxu0 %v1212
        %1265 = vmatprep.subr.bf16.mxu0 0
        %1266 = vmatpush2.bf16.msra.mxu0 %v1211
        %1267 = vmatprep.mubr.bf16.mxu0 %v1106
        %1268 = vmatmul.mubr.bf16.gmra.mxu0 %v1105
        %v1269 = vpop.f32.mrf.mxu0
        %v1270 = vadd.f32 0.0, %v1269
        %v1271 = vpop.f32.mrf.mxu0
        %v1272 = vpop.f32.mrf.mxu0
        %v1273 = vpop.f32.mrf.mxu0
        %1274 = vdwg.mxu0
        %1275 = vst [vmem:[%s337] sm:$0xff] %v1270
        %s1276 = sand.u32 %s165, 1
        %s1277 = scalar_lea.sflag [#allocation4], %s1276
        %s1278 = sand.u32 %s165, 1
        %s1279 = smul.addr %s1278, 8
        %s1280 = scalar_lea.vmem [#allocation13], %s1279
        // Predicated region
        $region69: #{tpu_custom_call.1} parent=43 // pred_check
          %p1281 = pneg %p175
        $region70: #{tpu_custom_call.1} parent=43 // pred_check_branch
          %1283 = sbr.rel (%p1281) target = $region72
        $region71: #{tpu_custom_call.1} parent=43 // pred_region
          %s1285 = ssub.s32 128, 128
          %1286 = vsyncadd %s1277, %s1285
          %s1287 = smul.addr %s26, 128
          %s1288 = scalar_lea.hbm %s6, %s1287
          %s1290 = sshll.u32 %s1280, 4
          %s1291 = int_to_ptr.vmem [resolvable:$true] %s1290
          %1293 = dma.vmem_to_hbm [thread:$0]  %s1291, 128, %s1288, %s1277
        $region72: #{tpu_custom_call.1} parent=43 // pred_fallthru
          _
      $region44: #{tpu_custom_call.1} parent=5 // pred_fallthru
        _
      %p1294 = scmp.le.s32.totalorder 2, %s21
      // Predicated region
      $region73: #{tpu_custom_call.1} parent=5 // pred_check
        %p1295 = pneg %p1294
      $region74: #{tpu_custom_call.1} parent=5 // pred_check_branch
        %1297 = sbr.rel (%p1295) target = $region76
      $region75: #{tpu_custom_call.1} parent=5 // pred_region
        %s1298 = ssub.s32 %s21, 2
        // Predicated region
        $region77: #{tpu_custom_call.1} parent=75 // pred_check
          %p1299 = pneg %p181
        $region78: #{tpu_custom_call.1} parent=75 // pred_check_branch
          %1301 = sbr.rel (%p1299) target = $region80
        $region79: #{tpu_custom_call.1} parent=75 // pred_region
          %s1302 = sand.u32 %s166, 1
          %s1303 = scalar_lea.sflag [#allocation4], %s1302
          %s1304 = sand.u32 %s166, 1
          %s1305 = smul.addr %s1304, 8
          %s1306 = scalar_lea.vmem [#allocation13], %s1305
          %1307 = dma.done %s1303, 128
        $region80: #{tpu_custom_call.1} parent=75 // pred_fallthru
          _
      $region76: #{tpu_custom_call.1} parent=5 // pred_fallthru
        _
    $region6: #{tpu_custom_call.1} parent=1 // loop_footer
      %s25 = sadd.s32 1, %s21
    $region7: #{tpu_custom_call.1} parent=1 // loop_footer_branch
      %20 = sbr.rel target = $region3
    $region8: #{tpu_custom_call.1} parent=1 // loop_exit
      _
    %1308 = vsyncpa [#allocation3], 1
    %s1309 = scalar_lea.sflag [#allocation3], 1
    %1310 = vsyncpa %s1309, 1
    %1311 = vsyncpa [#allocation6], 1
    %1312 = vsyncpa [#allocation9], 1
    %1313 = vsyncpa [#allocation12], 1
    %1314 = vsyncpa [#allocation4], 1
    %s1315 = scalar_lea.sflag [#allocation4], 1
    %1316 = vsyncpa %s1315, 1

</llo_original>
